<compile_context>
chip_gen: v7x
topology: tpu7x:2x2x1
jax: 0.10.0
libtpu: 0.0.40
codegen_flags: <defaults>
</compile_context>

<pallas_src>
import functools

import jax
import jax.numpy as jnp
from jax.experimental import pallas as pl
from jax.experimental.pallas import tpu as pltpu


def _make_loss_kernel(gan_loss: str, gp_lambda: float, has_gp: bool,
                      seg_bounds):
    """Builds the kernel body for a static GAN-loss variant.

    seg_bounds: 4 static (start, end) element ranges inside the packed
    (1, P) input, ordered [real0, real1, fake0, fake1]. Padding elements
    (>= seg_bounds[-1][1]) get a zero coefficient so they never contribute.
    """
    inv_n = [1.0 / float(e - s) for (s, e) in seg_bounds]

    def kernel(x_ref, gp_ref, out_ref):
        x = x_ref[...]                                    # (1, P) f32, lane-dense
        idx = jax.lax.broadcasted_iota(jnp.int32, x.shape, dimension=1)
        seg = [(idx >= s) & (idx < e) for (s, e) in seg_bounds]
        segf = [m.astype(jnp.float32) for m in seg]
        is_real = seg[0] | seg[1]                         # target=1 segments

        if gan_loss == "WGANGP":
            # -mean(r0) - mean(r1) + mean(f0) + mean(f1)  (+ gp_lambda*gp)
            coef = (-inv_n[0]) * segf[0] + (-inv_n[1]) * segf[1] \
                   + inv_n[2] * segf[2] + inv_n[3] * segf[3]
            loss = jnp.sum(x * coef)
            if has_gp:
                loss = loss + jnp.float32(gp_lambda) * gp_ref[0, 0]
        elif gan_loss == "NSGAN":
            # nn.BCELoss (mean), target=1 for real, 0 for fake; log clamped
            # at -100 per element (PyTorch semantics).
            coef = -(inv_n[0] * segf[0] + inv_n[1] * segf[1]
                     + inv_n[2] * segf[2] + inv_n[3] * segf[3])
            term_real = jnp.maximum(jnp.log(x), -100.0)
            term_fake = jnp.maximum(jnp.log(1.0 - x), -100.0)
            term = jnp.where(is_real, term_real, term_fake)
            loss = jnp.sum(term * coef)
        elif gan_loss == "LSGAN":
            # 0.5 * (MSE(r0,1) + MSE(r1,1) + MSE(f0,0) + MSE(f1,0))
            coef = 0.5 * (inv_n[0] * segf[0] + inv_n[1] * segf[1]
                          + inv_n[2] * segf[2] + inv_n[3] * segf[3])
            target = segf[0] + segf[1]                    # 1 on real, else 0
            diff = x - target
            loss = jnp.sum(diff * diff * coef)
        elif gan_loss == "hinge":
            coef = (inv_n[0] * segf[0] + inv_n[1] * segf[1]
                    + inv_n[2] * segf[2] + inv_n[3] * segf[3])
            term_real = jnp.maximum(1.0 - x, 0.0)
            term_fake = jnp.maximum(x + 1.0, 0.0)
            term = jnp.where(is_real, term_real, term_fake)
            loss = jnp.sum(term * coef)
        else:
            raise TypeError("self.gan_loss is not valid")

        out_ref[0, 0] = loss

    return kernel


@functools.partial(jax.jit,
                   static_argnames=("gan_loss", "gp_lambda", "has_gp"))
def _loss_d_call(r0, r1, f0, f1, gp_arr, *, gan_loss, gp_lambda, has_gp):
    # Pack the four validity tensors into one lane-dense (1, P) block.
    parts = [a.astype(jnp.float32).reshape(-1) for a in (r0, r1, f0, f1)]
    sizes = [int(p.shape[0]) for p in parts]
    bounds, off = [], 0
    for n in sizes:
        bounds.append((off, off + n))
        off += n
    total = off
    padded = max(128, ((total + 127) // 128) * 128)
    flat = jnp.concatenate(parts)
    flat = jnp.pad(flat, (0, padded - total))
    x = flat.reshape(1, padded)

    kernel = _make_loss_kernel(gan_loss, float(gp_lambda), has_gp,
                               tuple(bounds))
    out = pl.pallas_call(
        kernel,
        out_shape=jax.ShapeDtypeStruct((1, 1), jnp.float32),
        in_specs=[
            pl.BlockSpec(memory_space=pltpu.MemorySpace.VMEM),  # packed data
            pl.BlockSpec(memory_space=pltpu.MemorySpace.SMEM),  # gp scalar
        ],
        out_specs=pl.BlockSpec(memory_space=pltpu.MemorySpace.SMEM),
    )(x, gp_arr)
    return out[0, 0]


def volumetric_design_loss_d(real_validity_voxel, fake_validity_voxel, gp=None,
                             *, gan_loss="WGANGP", gp_lambda=10):
    """JAX/Pallas equivalent of VolumetricDesignLoss_D.forward."""
    r0, r1 = real_validity_voxel
    f0, f1 = fake_validity_voxel
    has_gp = gp is not None
    gp_arr = jnp.asarray(0.0 if gp is None else gp,
                         dtype=jnp.float32).reshape(1, 1)
    return _loss_d_call(
        jnp.asarray(r0, jnp.float32), jnp.asarray(r1, jnp.float32),
        jnp.asarray(f0, jnp.float32), jnp.asarray(f1, jnp.float32),
        gp_arr, gan_loss=gan_loss, gp_lambda=float(gp_lambda), has_gp=has_gp)


# ----------------------------- pure-JAX reference ---------------------------
def _reference(real, fake, gp, gan_loss, gp_lambda):
    r0, r1 = [x.astype(jnp.float32) for x in real]
    f0, f1 = [x.astype(jnp.float32) for x in fake]
    if gan_loss == "WGANGP":
        d = -jnp.mean(r0) - jnp.mean(r1) + jnp.mean(f0) + jnp.mean(f1)
        return d + (gp_lambda * gp if gp is not None else 0.0)
    if gan_loss == "NSGAN":
        bce1 = lambda x: -jnp.mean(jnp.maximum(jnp.log(x), -100.0))
        bce0 = lambda x: -jnp.mean(jnp.maximum(jnp.log(1.0 - x), -100.0))
        return bce1(r0) + bce1(r1) + bce0(f0) + bce0(f1)
    if gan_loss == "LSGAN":
        return 0.5 * (jnp.mean((r0 - 1) ** 2) + jnp.mean((r1 - 1) ** 2)
                      + jnp.mean(f0 ** 2) + jnp.mean(f1 ** 2))
    if gan_loss == "hinge":
        relu = lambda v: jnp.maximum(v, 0.0)
        return (jnp.mean(relu(1 - r0)) + jnp.mean(relu(1 - r1))
                + jnp.mean(relu(f0 + 1)) + jnp.mean(relu(f1 + 1)))
    raise TypeError("invalid gan_loss")


if __name__ == "__main__":
    key = jax.random.PRNGKey(0)
    k0, k1, k2, k3, kg = jax.random.split(key, 5)

    B0, B1 = 8, 8  # batch sizes of the two voxel-discriminator heads
    real0 = jax.random.normal(k0, (B0, 1), jnp.float32)
    real1 = jax.random.normal(k1, (B1, 1), jnp.float32)
    fake0 = jax.random.normal(k2, (B0, 1), jnp.float32)
    fake1 = jax.random.normal(k3, (B1, 1), jnp.float32)
    gp = jax.random.uniform(kg, (), jnp.float32)

    ok = True

    # WGANGP (with and without gp)
    for gp_val in (gp, None):
        out = volumetric_design_loss_d([real0, real1], [fake0, fake1], gp_val,
                                       gan_loss="WGANGP", gp_lambda=10)
        jax.block_until_ready(out)
        ref = _reference([real0, real1], [fake0, fake1], gp_val, "WGANGP", 10)
        ok &= bool(jnp.allclose(out, ref, atol=1e-5, rtol=1e-5))

    # LSGAN / hinge on raw scores
    for mode in ("LSGAN", "hinge"):
        out = volumetric_design_loss_d([real0, real1], [fake0, fake1],
                                       gan_loss=mode)
        jax.block_until_ready(out)
        ref = _reference([real0, real1], [fake0, fake1], None, mode, 10)
        ok &= bool(jnp.allclose(out, ref, atol=1e-5, rtol=1e-5))

    # NSGAN expects probabilities in (0, 1)
    sig = jax.nn.sigmoid
    out = volumetric_design_loss_d([sig(real0), sig(real1)],
                                   [sig(fake0), sig(fake1)],
                                   gan_loss="NSGAN")
    jax.block_until_ready(out)
    ref = _reference([sig(real0), sig(real1)], [sig(fake0), sig(fake1)],
                     None, "NSGAN", 10)
    ok &= bool(jnp.allclose(out, ref, atol=1e-5, rtol=1e-5))

    if ok:
        print("KERNEL_OK")
    else:
        print("MISMATCH")
</pallas_src>

<mosaic_0001>
module attributes {stable_mosaic.version = 11 : i64} {
  func.func @kernel(%arg0: memref<1x128xf32, #tpu.memory_space<vmem>>, %arg1: memref<1x1xf32, #tpu.memory_space<smem>>, %arg2: memref<1x1xf32, #tpu.memory_space<smem>>) attributes {dimension_semantics = [], scalar_prefetch = 0 : i64, scratch_operands = 0 : i64, tpu.core_type = #tpu.core_type<tc>} {
    %c0 = arith.constant 0 : index
    %c0_0 = arith.constant 0 : index
    %0 = vector.load %arg0[%c0, %c0_0] : memref<1x128xf32, #tpu.memory_space<vmem>>, vector<1x128xf32>
    %1 = tpu.iota {dimensions = array<i32: 1>} : vector<1x128xi32>
    %c0_i32 = arith.constant 0 : i32
    %2 = vector.broadcast %c0_i32 : i32 to vector<1x128xi32>
    %3 = arith.cmpi sge, %1, %2 : vector<1x128xi32>
    %c8_i32 = arith.constant 8 : i32
    %4 = vector.broadcast %c8_i32 : i32 to vector<1x128xi32>
    %5 = arith.cmpi slt, %1, %4 : vector<1x128xi32>
    %6 = arith.andi %3, %5 : vector<1x128xi1>
    %c8_i32_1 = arith.constant 8 : i32
    %7 = vector.broadcast %c8_i32_1 : i32 to vector<1x128xi32>
    %8 = arith.cmpi sge, %1, %7 : vector<1x128xi32>
    %c16_i32 = arith.constant 16 : i32
    %9 = vector.broadcast %c16_i32 : i32 to vector<1x128xi32>
    %10 = arith.cmpi slt, %1, %9 : vector<1x128xi32>
    %11 = arith.andi %8, %10 : vector<1x128xi1>
    %c16_i32_2 = arith.constant 16 : i32
    %12 = vector.broadcast %c16_i32_2 : i32 to vector<1x128xi32>
    %13 = arith.cmpi sge, %1, %12 : vector<1x128xi32>
    %c24_i32 = arith.constant 24 : i32
    %14 = vector.broadcast %c24_i32 : i32 to vector<1x128xi32>
    %15 = arith.cmpi slt, %1, %14 : vector<1x128xi32>
    %16 = arith.andi %13, %15 : vector<1x128xi1>
    %c24_i32_3 = arith.constant 24 : i32
    %17 = vector.broadcast %c24_i32_3 : i32 to vector<1x128xi32>
    %18 = arith.cmpi sge, %1, %17 : vector<1x128xi32>
    %c32_i32 = arith.constant 32 : i32
    %19 = vector.broadcast %c32_i32 : i32 to vector<1x128xi32>
    %20 = arith.cmpi slt, %1, %19 : vector<1x128xi32>
    %21 = arith.andi %18, %20 : vector<1x128xi1>
    %22 = arith.extui %6 : vector<1x128xi1> to vector<1x128xi32>
    %23 = arith.sitofp %22 : vector<1x128xi32> to vector<1x128xf32>
    %24 = arith.extui %11 : vector<1x128xi1> to vector<1x128xi32>
    %25 = arith.sitofp %24 : vector<1x128xi32> to vector<1x128xf32>
    %26 = arith.extui %16 : vector<1x128xi1> to vector<1x128xi32>
    %27 = arith.sitofp %26 : vector<1x128xi32> to vector<1x128xf32>
    %28 = arith.extui %21 : vector<1x128xi1> to vector<1x128xi32>
    %29 = arith.sitofp %28 : vector<1x128xi32> to vector<1x128xf32>
    %cst = arith.constant -1.250000e-01 : f32
    %30 = vector.broadcast %cst : f32 to vector<1x128xf32>
    %31 = arith.mulf %30, %23 : vector<1x128xf32>
    %cst_4 = arith.constant -1.250000e-01 : f32
    %32 = vector.broadcast %cst_4 : f32 to vector<1x128xf32>
    %33 = arith.mulf %32, %25 : vector<1x128xf32>
    %34 = arith.addf %31, %33 : vector<1x128xf32>
    %cst_5 = arith.constant 1.250000e-01 : f32
    %35 = vector.broadcast %cst_5 : f32 to vector<1x128xf32>
    %36 = arith.mulf %35, %27 : vector<1x128xf32>
    %37 = arith.addf %34, %36 : vector<1x128xf32>
    %cst_6 = arith.constant 1.250000e-01 : f32
    %38 = vector.broadcast %cst_6 : f32 to vector<1x128xf32>
    %39 = arith.mulf %38, %29 : vector<1x128xf32>
    %40 = arith.addf %37, %39 : vector<1x128xf32>
    %41 = arith.mulf %0, %40 : vector<1x128xf32>
    %42 = vector.shape_cast %41 : vector<1x128xf32> to vector<1x1x128xf32>
    %cst_7 = arith.constant dense<0.000000e+00> : vector<1xf32>
    %43 = vector.multi_reduction <add>, %42, %cst_7 [1, 2] : vector<1x1x128xf32> to vector<1xf32>
    %44 = vector.shape_cast %43 : vector<1xf32> to vector<1x1x1xf32>
    %45 = vector.extract %44[0, 0, 0] : f32 from vector<1x1x1xf32>
    %c0_8 = arith.constant 0 : index
    %c0_9 = arith.constant 0 : index
    %46 = memref.load %arg1[%c0_8, %c0_9] : memref<1x1xf32, #tpu.memory_space<smem>>
    %cst_10 = arith.constant 1.000000e+01 : f32
    %47 = arith.mulf %cst_10, %46 : f32
    %48 = arith.addf %45, %47 : f32
    %c0_11 = arith.constant 0 : index
    %c0_12 = arith.constant 0 : index
    %49 = memref.load %arg2[%c0_11, %c0_12] : memref<1x1xf32, #tpu.memory_space<smem>>
    memref.store %48, %arg2[%c0_11, %c0_12] : memref<1x1xf32, #tpu.memory_space<smem>>
    return
  }
}

</mosaic_0001>

<llo_original>
// kernel: _loss_d_call.1
$region0: #{_loss_d_call.1}
  #allocation0 [shape = 'u32[]', space=smem, size = 0x4, offset = 0x4, fixed_abs, tag = 'smem constant byte address 0x4 - core index']
  #allocation1 [shape = 'u32[144,128]{1,0:T(1,128)}', space=vmem, size = 0x12000, scoped, tag = 'internal scratch']
  #allocation2 [shape = 'f32[1,1]{1,0:T(1,128)S(6)}', space=smem, size = 0x200, scoped, tag = 'scoped memory for _loss_d_call.1']
  %s0 = inlined_call_operand.vmem [shape: f32[1,128], index: 0, kind: input, shape index: {}]
  %s1 = inlined_call_operand.<no memory space> [shape: f32[1,1], index: 1, kind: input, shape index: {}]
  %s2 = inlined_call_operand.hbm [shape: f32[1,1], index: 2, kind: output, shape index: {}]
  %s3 = sld [smem:[#allocation0]]
  $region18: #{_loss_d_call.1} parent=0
    _
  %s5 = ssub.s32 1, %s3
  %s6 = scalar_select 0, %s5, %s3
  %7 = sst [smem:[#allocation2]] %s1
  $region1: #{_loss_d_call.1} parent=0
    #allocation3 [shape = 'u8[512]{0}', space=smem, size = 0x200, scoped, tag = 'output window, operand 0, single buffered']
    #allocation4 [shape = 's32[1]{0}', space=sflag, size = 0x4, scoped, tag = 'scoped memory for _loss_d_call.1']
    %8 = vsyncpa [#allocation4], 0
    // Predicated region
    $region2: #{_loss_d_call.1} parent=1 // pred_check
      _
    $region3: #{_loss_d_call.1} parent=1 // pred_check_branch
      %10 = sbr.rel (0) target = $region5
    $region4: #{_loss_d_call.1} parent=1 // pred_region
      _
    $region5: #{_loss_d_call.1} parent=1 // pred_fallthru
      _
    // Predicated region
    $region6: #{_loss_d_call.1} parent=1 // pred_check
      _
    $region7: #{_loss_d_call.1} parent=1 // pred_check_branch
      %12 = sbr.rel (0) target = $region9
    $region8: #{_loss_d_call.1} parent=1 // pred_region
      _
    $region9: #{_loss_d_call.1} parent=1 // pred_fallthru
      _
    %v13 = vld [vmem:[%s0] sm:$0x1]
    %v14 = vlaneseq
    %v15 = vand.u32 %v14, 127
    %vm16 = vcmp.ge.s32.totalorder %v15, 0
    %vm17 = vcmp.lt.s32.totalorder %v15, 8
    %vm18 = vmand %vm16, %vm17
    %vm19 = vcmp.ge.s32.totalorder %v15, 8
    %vm20 = vcmp.lt.s32.totalorder %v15, 16
    %vm21 = vmand %vm19, %vm20
    %vm22 = vcmp.ge.s32.totalorder %v15, 16
    %vm23 = vcmp.lt.s32.totalorder %v15, 24
    %vm24 = vmand %vm22, %vm23
    %vm25 = vcmp.ge.s32.totalorder %v15, 24
    %vm26 = vcmp.lt.s32.totalorder %v15, 32
    %vm27 = vmand %vm25, %vm26
    %v28 = vsel %vm18, 1, 0
    %v29 = vcvt.s32.f32 %v28
    %v30 = vsel %vm21, 1, 0
    %v31 = vcvt.s32.f32 %v30
    %v32 = vsel %vm24, 1, 0
    %v33 = vcvt.s32.f32 %v32
    %v34 = vsel %vm27, 1, 0
    %v35 = vcvt.s32.f32 %v34
    %v36 = vmul.f32 %v29, -0.125
    %v37 = vmul.f32 %v31, -0.125
    %v38 = vadd.f32 %v36, %v37
    %v39 = vmul.f32 %v33, 0.125
    %v40 = vadd.f32 %v38, %v39
    %v41 = vmul.f32 %v35, 0.125
    %v42 = vadd.f32 %v40, %v41
    %v43 = vmul.f32 %v13, %v42
    %vm44 = vcmask 1040384
    %v45 = vsel %vm44, %v43, 0.0
    %46 = vadd.xlane.f32.xlu0 %v45
    %v47 = vpop.xlane.xlu0 %46
    %v48 = vrot.slane %v47, 4
    %v49 = vadd.f32 %v47, %v48
    %v50 = vrot.slane %v49, 2
    %v51 = vadd.f32 %v49, %v50
    %v52 = vrot.slane %v51, 1
    %v53 = vadd.f32 %v51, %v52
    %s54 = vtos %v53
    %s55 = sld [smem:[#allocation2]]
    %s56 = smul.f32 %s55, 10.0
    %s57 = sadd.f32 %s54, %s56
    %s58 = scalar_lea.smem [#allocation3], 0
    %59 = sst [smem:[%s58]] %s57
    // Predicated region
    $region10: #{_loss_d_call.1} parent=1 // pred_check
      _
    $region11: #{_loss_d_call.1} parent=1 // pred_check_branch
      %61 = sbr.rel (0) target = $region13
    $region12: #{_loss_d_call.1} parent=1 // pred_region
      %s63 = ssub.s32 16, 16
      %64 = vsyncadd [#allocation4], %s63
      %67 = dma.smem_to_hbm [#allocation3], 16, %s2, [#allocation4]
    $region13: #{_loss_d_call.1} parent=1 // pred_fallthru
      _
    // Predicated region
    $region14: #{_loss_d_call.1} parent=1 // pred_check
      _
    $region15: #{_loss_d_call.1} parent=1 // pred_check_branch
      %69 = sbr.rel (0) target = $region17
    $region16: #{_loss_d_call.1} parent=1 // pred_region
      %70 = dma.done [#allocation4], 16
    $region17: #{_loss_d_call.1} parent=1 // pred_fallthru
      _
    %71 = sfence
    %72 = vsyncpa [#allocation4], 1

</llo_original>
